<compile_context>
chip_gen: v7x
topology: tpu7x:2x2x1
jax: 0.10.0
libtpu: 0.0.40
codegen_flags: <defaults>
</compile_context>

<pallas_src>
import numpy as np
import jax
import jax.numpy as jnp
from jax.experimental import pallas as pl
from jax.experimental.pallas import tpu as pltpu

# ---- Hyperparameters (small shapes consistent with the PyTorch module) ----
VOCAB_SIZE   = 50
EMBED_DIM    = 32          # embed_dim
NUM_CLASSES  = 16          # num_classes
NUM_KERNELS  = 16          # num_kernels per conv branch
KERNEL_SIZES = (3, 4, 5)   # kernel_size_list
SEQ_LEN      = 8
BATCH        = 2

KMAX     = max(KERNEL_SIZES)
N_BRANCH = len(KERNEL_SIZES)
FEAT     = N_BRANCH * NUM_KERNELS        # 48 pooled features feeding the FC
N_TOK    = SEQ_LEN * BATCH               # rows of the seq-major activation block

# PyTorch's conv errors if the sequence is shorter than a kernel; bias-after-max
# below is exact only under the same condition (>= 1 valid window per branch).
assert SEQ_LEN >= max(KERNEL_SIZES), "SEQ_LEN must be >= max(KERNEL_SIZES)"

# MXU operand dtype: bf16 is native on v5e/v6e/v7x (f32 matmuls are multi-pass).
# The one-hot LHS stays exact in bf16; only weights round (~1e-3 relative).
MXU_DTYPE = jnp.bfloat16
MASK_NEG  = -1e30          # additive mask sentinel; mask/max stay in f32

# ---- Single packed-weights blob layout.  All row offsets / block heights are
# ---- multiples of the bf16 sublane tile (16) so every static sub-view the
# ---- kernel takes starts on a native (16, 128) tile boundary. ---------------
_SUB = 16 if MXU_DTYPE == jnp.bfloat16 else 8


def _ru(x, m):
    return (x + m - 1) // m * m


VPAD       = _ru(VOCAB_SIZE, _SUB)            # 64: zero-padded vocab rows
ROW_M      = 0                                # KMAX blocks of (VPAD, FEAT)
ROW_MASK   = ROW_M + KMAX * VPAD              # (N_TOK, FEAT) additive mask
ROW_BCONV  = ROW_MASK + _ru(N_TOK, _SUB)      # (1, FEAT) conv bias
ROW_WFC    = ROW_BCONV + _SUB                 # (FEAT, FEAT) FC weight (C zero-padded)
ROW_BFC    = ROW_WFC + _ru(FEAT, _SUB)        # (1, FEAT) FC bias (C zero-padded)
TOTAL_ROWS = ROW_BFC + _SUB                   # 416 rows x 48 lanes bf16 ~ 40 KiB

# TODO(synk): nn.Dropout(0.5) is stochastic only in training; this forward is
#             eval-mode semantics (dropout == identity).


def _cnn_kernel(ids_ref, w_ref, out_ref):
    N, F, C, B = N_TOK, FEAT, NUM_CLASSES, BATCH

    # One-hot token rows in native seq-major order (row r = t*B + b).  0/1 are
    # exact in bf16; columns >= VOCAB_SIZE never fire and hit zero weight rows.
    ids = ids_ref[...]                                            # (N, 1) int32
    vocab_iota = jax.lax.broadcasted_iota(jnp.int32, (N, VPAD), 1)
    onehot = (ids == vocab_iota).astype(MXU_DTYPE)                # (N, VPAD)

    # Embedding lookup + all conv branches fused: per window offset j, one bf16
    # MXU matmul against the pre-folded (table @ Wconv_j) block, realigned in
    # time with an XLU sublane roll.  Rows that wrap are masked below.
    conv = None
    for j in range(KMAX):
        mj = w_ref[ROW_M + j * VPAD: ROW_M + (j + 1) * VPAD, :]   # (VPAD, F) bf16
        part = jnp.dot(onehot, mj, preferred_element_type=jnp.float32)
        if j:
            part = pltpu.roll(part, shift=(N - j * B) % N, axis=0)
        conv = part if conv is None else conv + part              # (N, F) f32

    # Pack-time constant additive validity mask (0 / -1e30): window positions
    # running past the sequence end (per branch) drop out of the max-pool.
    conv = conv + w_ref[ROW_MASK: ROW_MASK + N, :].astype(jnp.float32)

    # Max-pool over time.  Rows are t-major / b-minor, so a roll of step*B
    # combines t with t+step; after log2(S) folds rows [0, B) hold the
    # per-example maxima.  (Power-of-two SEQ_LEN; reshape fallback otherwise.)
    if SEQ_LEN & (SEQ_LEN - 1) == 0:
        x = conv
        step = (SEQ_LEN // 2) * B
        while step >= B:
            x = jnp.maximum(x, pltpu.roll(x, shift=(N - step) % N, axis=0))
            step //= 2
        pooled = x[0:B, :]                                        # (B, F) f32
    else:
        pooled = jnp.max(conv.reshape(SEQ_LEN, B, F), axis=0)

    # Bias after the max is exact: ReLU is monotone, the bias is constant over
    # time, and every branch has >= 1 valid window (SEQ_LEN assert above).
    bconv = w_ref[ROW_BCONV: ROW_BCONV + 1, :].astype(jnp.float32)
    feat = jnp.maximum(pooled + bconv, 0.0)                       # (B, F)

    # Final FC (class columns zero-padded out to F lanes inside the blob).
    wfc = w_ref[ROW_WFC: ROW_WFC + F, :]                          # (F, F) bf16
    bfc = w_ref[ROW_BFC: ROW_BFC + 1, :].astype(jnp.float32)
    logits = jnp.dot(feat.astype(MXU_DTYPE), wfc,
                     preferred_element_type=jnp.float32) + bfc    # (B, F) f32
    out_ref[...] = logits[:, :C].astype(out_ref.dtype)
    # TODO(synk): if BATCH / NUM_CLASSES grow, emit a lane-dense (B, 128)
    # output and add grid=(B//bt,) with dimension_semantics=("parallel",) so
    # both v7x TensorCores get work (block sized for its 64 MiB VMEM).


@jax.jit
def cnn_1d_forward(token_ids, weights_blob):
    """token_ids: (S, B) int32, seq-major like torchtext. Returns (B, C) f32."""
    S, B = token_ids.shape
    assert (S, B) == (SEQ_LEN, BATCH)
    # Row-major (S, B) -> (S*B, 1) is a pure bitcast: no transpose/pad/copy.
    ids = token_ids.reshape(S * B, 1)
    vmem = pl.BlockSpec(memory_space=pltpu.MemorySpace.VMEM)
    return pl.pallas_call(
        _cnn_kernel,
        out_shape=jax.ShapeDtypeStruct((BATCH, NUM_CLASSES), jnp.float32),
        in_specs=[vmem, vmem],
        out_specs=vmem,
    )(ids, weights_blob)


def init_params(key):
    """Per-branch params in the same layout convention as the PyTorch module."""
    ks = jax.random.split(key, 3 + 2 * len(KERNEL_SIZES))
    params = {"embed": jax.random.normal(
        ks[0], (VOCAB_SIZE, EMBED_DIM), jnp.float32) * 0.1}
    for i, k in enumerate(KERNEL_SIZES):
        # PyTorch conv weight (K, 1, k, E) flattened to (k*E, K), (j,e)-major.
        params[f"conv{k}_w"] = jax.random.normal(
            ks[1 + 2 * i], (k * EMBED_DIM, NUM_KERNELS), jnp.float32) * 0.1
        params[f"conv{k}_b"] = jax.random.normal(
            ks[2 + 2 * i], (1, NUM_KERNELS), jnp.float32) * 0.1
    params["fc_w"] = jax.random.normal(
        ks[-2], (FEAT, NUM_CLASSES), jnp.float32) * 0.1
    params["fc_b"] = jax.random.normal(
        ks[-1], (1, NUM_CLASSES), jnp.float32) * 0.1
    return params


def pack_params(params):
    """One-time packing: fold the embedding table into every conv-offset weight
    block, precompute the additive validity mask, and lay everything out in one
    lane-contiguous MXU-dtype blob with 16-row-aligned static sub-views."""
    K, E = NUM_KERNELS, EMBED_DIM
    blob = np.zeros((TOTAL_ROWS, FEAT), np.float32)

    # Table-folded conv weights: block j holds table @ Wconv[j*E:(j+1)*E, :].
    table = np.asarray(params["embed"], np.float64)
    for i, k in enumerate(KERNEL_SIZES):
        w = np.asarray(params[f"conv{k}_w"], np.float64)             # (k*E, K)
        for j in range(k):
            mj = table @ w[j * E:(j + 1) * E, :]                     # (V, K)
            blob[ROW_M + j * VPAD: ROW_M + j * VPAD + VOCAB_SIZE,
                 i * K:(i + 1) * K] = mj
        blob[ROW_BCONV, i * K:(i + 1) * K] = np.asarray(
            params[f"conv{k}_b"]).reshape(-1)

    # Additive time/branch validity mask, seq-major rows (t-major, b-minor).
    mask_t = np.zeros((SEQ_LEN, FEAT), np.float32)
    for i, k in enumerate(KERNEL_SIZES):
        mask_t[SEQ_LEN - k + 1:, i * K:(i + 1) * K] = MASK_NEG
    blob[ROW_MASK: ROW_MASK + N_TOK, :] = np.repeat(mask_t, BATCH, axis=0)

    # FC, class columns zero-padded out to FEAT lanes.
    blob[ROW_WFC: ROW_WFC + FEAT, :NUM_CLASSES] = np.asarray(params["fc_w"])
    blob[ROW_BFC, :NUM_CLASSES] = np.asarray(params["fc_b"]).reshape(-1)
    return jnp.asarray(blob, MXU_DTYPE)


def reference_forward(token_ids, params):
    """Pure-JAX reference mirroring the PyTorch forward (eval mode), f32."""
    emb = params["embed"][token_ids]                 # (S, B, E) gather
    emb = jnp.transpose(emb, (1, 0, 2))              # (B, S, E)
    B = emb.shape[0]
    hi = jax.lax.Precision.HIGHEST
    pooled = []
    for k in KERNEL_SIZES:
        L = SEQ_LEN - k + 1
        windows = jnp.stack(
            [emb[:, t:t + k, :].reshape(B, -1) for t in range(L)], axis=1)
        conv = jnp.dot(windows, params[f"conv{k}_w"],
                       precision=hi) + params[f"conv{k}_b"][None]
        pooled.append(jnp.max(jax.nn.relu(conv), axis=1))
    feat = jnp.concatenate(pooled, axis=-1)
    return jnp.dot(feat, params["fc_w"], precision=hi) + params["fc_b"]


if __name__ == "__main__":
    key = jax.random.PRNGKey(0)
    pkey, xkey = jax.random.split(key)
    params = init_params(pkey)
    blob = pack_params(params)

    # Token ids, seq-major (S, B) — torchtext Field(sequential=True) convention.
    x = jax.random.randint(xkey, (SEQ_LEN, BATCH), 0, VOCAB_SIZE, jnp.int32)

    out = cnn_1d_forward(x, blob)
    out = jax.block_until_ready(out)
    assert out.shape == (BATCH, NUM_CLASSES)

    ref = reference_forward(x, params)
    err = float(jnp.max(jnp.abs(out - ref)))
    # bf16 MXU weights round to ~1e-3 relative; tolerance loosened accordingly.
    assert jnp.allclose(out, ref, atol=2e-2, rtol=2e-2), f"max abs err: {err}"

    print("KERNEL_OK")
</pallas_src>

<mosaic_0001>
module attributes {stable_mosaic.version = 11 : i64} {
  func.func @_cnn_kernel(%arg0: memref<16x1xi32, #tpu.memory_space<vmem>>, %arg1: memref<416x48xbf16, #tpu.memory_space<vmem>>, %arg2: memref<2x16xf32, #tpu.memory_space<vmem>>) attributes {dimension_semantics = [], scalar_prefetch = 0 : i64, scratch_operands = 0 : i64, tpu.core_type = #tpu.core_type<tc>} {
    %c0 = arith.constant 0 : index
    %c0_0 = arith.constant 0 : index
    %0 = vector.load %arg0[%c0, %c0_0] : memref<16x1xi32, #tpu.memory_space<vmem>>, vector<16x1xi32>
    %1 = tpu.iota {dimensions = array<i32: 1>} : vector<16x64xi32>
    %2 = vector.broadcast %0 : vector<16x1xi32> to vector<16x64xi32>
    %3 = arith.cmpi eq, %2, %1 : vector<16x64xi32>
    %4 = arith.extui %3 : vector<16x64xi1> to vector<16x64xi32>
    %5 = arith.sitofp %4 : vector<16x64xi32> to vector<16x64xf32>
    %6 = arith.truncf %5 : vector<16x64xf32> to vector<16x64xbf16>
    %c0_1 = arith.constant 0 : index
    %c0_2 = arith.constant 0 : index
    %7 = vector.load %arg1[%c0_1, %c0_2] : memref<416x48xbf16, #tpu.memory_space<vmem>>, vector<64x48xbf16>
    %cst = arith.constant dense<0.000000e+00> : vector<16x48xf32>
    %8 = tpu.matmul %6, %7, %cst {dimension_numbers = #tpu.dot_dimension_numbers<[1], [0], [0], [1], [0, 0, 1, 1], [], []>} : vector<16x64xbf16>, vector<64x48xbf16>, vector<16x48xf32> -> vector<16x48xf32>
    %c64 = arith.constant 64 : index
    %c0_3 = arith.constant 0 : index
    %9 = vector.load %arg1[%c64, %c0_3] : memref<416x48xbf16, #tpu.memory_space<vmem>>, vector<64x48xbf16>
    %cst_4 = arith.constant dense<0.000000e+00> : vector<16x48xf32>
    %10 = tpu.matmul %6, %9, %cst_4 {dimension_numbers = #tpu.dot_dimension_numbers<[1], [0], [0], [1], [0, 0, 1, 1], [], []>} : vector<16x64xbf16>, vector<64x48xbf16>, vector<16x48xf32> -> vector<16x48xf32>
    %c14_i32 = arith.constant 14 : i32
    %11 = tpu.dynamic_rotate %10 by %c14_i32 dim 0 : vector<16x48xf32>, i32 -> vector<16x48xf32>
    %12 = arith.addf %8, %11 : vector<16x48xf32>
    %c128 = arith.constant 128 : index
    %c0_5 = arith.constant 0 : index
    %13 = vector.load %arg1[%c128, %c0_5] : memref<416x48xbf16, #tpu.memory_space<vmem>>, vector<64x48xbf16>
    %cst_6 = arith.constant dense<0.000000e+00> : vector<16x48xf32>
    %14 = tpu.matmul %6, %13, %cst_6 {dimension_numbers = #tpu.dot_dimension_numbers<[1], [0], [0], [1], [0, 0, 1, 1], [], []>} : vector<16x64xbf16>, vector<64x48xbf16>, vector<16x48xf32> -> vector<16x48xf32>
    %c12_i32 = arith.constant 12 : i32
    %15 = tpu.dynamic_rotate %14 by %c12_i32 dim 0 : vector<16x48xf32>, i32 -> vector<16x48xf32>
    %16 = arith.addf %12, %15 : vector<16x48xf32>
    %c192 = arith.constant 192 : index
    %c0_7 = arith.constant 0 : index
    %17 = vector.load %arg1[%c192, %c0_7] : memref<416x48xbf16, #tpu.memory_space<vmem>>, vector<64x48xbf16>
    %cst_8 = arith.constant dense<0.000000e+00> : vector<16x48xf32>
    %18 = tpu.matmul %6, %17, %cst_8 {dimension_numbers = #tpu.dot_dimension_numbers<[1], [0], [0], [1], [0, 0, 1, 1], [], []>} : vector<16x64xbf16>, vector<64x48xbf16>, vector<16x48xf32> -> vector<16x48xf32>
    %c10_i32 = arith.constant 10 : i32
    %19 = tpu.dynamic_rotate %18 by %c10_i32 dim 0 : vector<16x48xf32>, i32 -> vector<16x48xf32>
    %20 = arith.addf %16, %19 : vector<16x48xf32>
    %c256 = arith.constant 256 : index
    %c0_9 = arith.constant 0 : index
    %21 = vector.load %arg1[%c256, %c0_9] : memref<416x48xbf16, #tpu.memory_space<vmem>>, vector<64x48xbf16>
    %cst_10 = arith.constant dense<0.000000e+00> : vector<16x48xf32>
    %22 = tpu.matmul %6, %21, %cst_10 {dimension_numbers = #tpu.dot_dimension_numbers<[1], [0], [0], [1], [0, 0, 1, 1], [], []>} : vector<16x64xbf16>, vector<64x48xbf16>, vector<16x48xf32> -> vector<16x48xf32>
    %c8_i32 = arith.constant 8 : i32
    %23 = tpu.dynamic_rotate %22 by %c8_i32 dim 0 : vector<16x48xf32>, i32 -> vector<16x48xf32>
    %24 = arith.addf %20, %23 : vector<16x48xf32>
    %c320 = arith.constant 320 : index
    %c0_11 = arith.constant 0 : index
    %25 = vector.load %arg1[%c320, %c0_11] : memref<416x48xbf16, #tpu.memory_space<vmem>>, vector<16x48xbf16>
    %26 = arith.extf %25 : vector<16x48xbf16> to vector<16x48xf32>
    %27 = arith.addf %24, %26 : vector<16x48xf32>
    %c8_i32_12 = arith.constant 8 : i32
    %28 = tpu.dynamic_rotate %27 by %c8_i32_12 dim 0 : vector<16x48xf32>, i32 -> vector<16x48xf32>
    %29 = arith.maximumf %27, %28 : vector<16x48xf32>
    %c12_i32_13 = arith.constant 12 : i32
    %30 = tpu.dynamic_rotate %29 by %c12_i32_13 dim 0 : vector<16x48xf32>, i32 -> vector<16x48xf32>
    %31 = arith.maximumf %29, %30 : vector<16x48xf32>
    %c14_i32_14 = arith.constant 14 : i32
    %32 = tpu.dynamic_rotate %31 by %c14_i32_14 dim 0 : vector<16x48xf32>, i32 -> vector<16x48xf32>
    %33 = arith.maximumf %31, %32 : vector<16x48xf32>
    %34 = vector.extract_strided_slice %33 {offsets = [0, 0], sizes = [2, 48], strides = [1, 1]} : vector<16x48xf32> to vector<2x48xf32>
    %c336 = arith.constant 336 : index
    %c0_15 = arith.constant 0 : index
    %35 = vector.load %arg1[%c336, %c0_15] : memref<416x48xbf16, #tpu.memory_space<vmem>>, vector<1x48xbf16>
    %36 = arith.extf %35 : vector<1x48xbf16> to vector<1x48xf32>
    %37 = vector.broadcast %36 : vector<1x48xf32> to vector<2x48xf32>
    %38 = arith.addf %34, %37 : vector<2x48xf32>
    %cst_16 = arith.constant 0.000000e+00 : f32
    %39 = vector.broadcast %cst_16 : f32 to vector<2x48xf32>
    %40 = arith.maximumf %38, %39 : vector<2x48xf32>
    %c352 = arith.constant 352 : index
    %c0_17 = arith.constant 0 : index
    %41 = vector.load %arg1[%c352, %c0_17] : memref<416x48xbf16, #tpu.memory_space<vmem>>, vector<48x48xbf16>
    %c400 = arith.constant 400 : index
    %c0_18 = arith.constant 0 : index
    %42 = vector.load %arg1[%c400, %c0_18] : memref<416x48xbf16, #tpu.memory_space<vmem>>, vector<1x48xbf16>
    %43 = arith.extf %42 : vector<1x48xbf16> to vector<1x48xf32>
    %44 = arith.truncf %40 : vector<2x48xf32> to vector<2x48xbf16>
    %cst_19 = arith.constant dense<0.000000e+00> : vector<2x48xf32>
    %45 = tpu.matmul %44, %41, %cst_19 {dimension_numbers = #tpu.dot_dimension_numbers<[1], [0], [0], [1], [0, 0, 1, 1], [], []>} : vector<2x48xbf16>, vector<48x48xbf16>, vector<2x48xf32> -> vector<2x48xf32>
    %46 = vector.broadcast %43 : vector<1x48xf32> to vector<2x48xf32>
    %47 = arith.addf %45, %46 : vector<2x48xf32>
    %48 = vector.extract_strided_slice %47 {offsets = [0, 0], sizes = [2, 16], strides = [1, 1]} : vector<2x48xf32> to vector<2x16xf32>
    %c0_20 = arith.constant 0 : index
    %c0_21 = arith.constant 0 : index
    %49 = vector.load %arg2[%c0_20, %c0_21] : memref<2x16xf32, #tpu.memory_space<vmem>>, vector<2x16xf32>
    tpu.vector_store %arg2[%c0_20, %c0_21], %48 {strides = array<i32>} : memref<2x16xf32, #tpu.memory_space<vmem>>, vector<2x16xf32>,
    return
  }
}

</mosaic_0001>

<llo_original>
// kernel: cnn_1d_forward.1
$region0: #{cnn_1d_forward.1}
  #allocation0 [shape = 'u32[]', space=smem, size = 0x4, offset = 0x4, fixed_abs, tag = 'smem constant byte address 0x4 - core index']
  #allocation1 [shape = 'u32[144,128]{1,0:T(1,128)}', space=vmem, size = 0x12000, scoped, tag = 'internal scratch']
  %s0 = inlined_call_operand.vmem [shape: s32[16,1], index: 0, kind: input, shape index: {}]
  %s1 = inlined_call_operand.vmem [shape: bf16[416,48], index: 1, kind: input, shape index: {}]
  %s2 = inlined_call_operand.hbm [shape: f32[2,16], index: 2, kind: output, shape index: {}]
  %s3 = sld [smem:[#allocation0]]
  $region18: #{cnn_1d_forward.1} parent=0
    _
  %s5 = ssub.s32 1, %s3
  %s6 = scalar_select 0, %s5, %s3
  $region1: #{cnn_1d_forward.1} parent=0
    #allocation2 [shape = 'u8[1024]{0}', space=vmem, size = 0x400, scoped, tag = 'output window, operand 0, single buffered']
    #allocation3 [shape = 's32[1]{0}', space=sflag, size = 0x4, scoped, tag = 'scoped memory for cnn_1d_forward.1']
    %7 = vsyncpa [#allocation3], 0
    // Predicated region
    $region2: #{cnn_1d_forward.1} parent=1 // pred_check
      _
    $region3: #{cnn_1d_forward.1} parent=1 // pred_check_branch
      %9 = sbr.rel (0) target = $region5
    $region4: #{cnn_1d_forward.1} parent=1 // pred_region
      _
    $region5: #{cnn_1d_forward.1} parent=1 // pred_fallthru
      _
    // Predicated region
    $region6: #{cnn_1d_forward.1} parent=1 // pred_check
      _
    $region7: #{cnn_1d_forward.1} parent=1 // pred_check_branch
      %11 = sbr.rel (0) target = $region9
    $region8: #{cnn_1d_forward.1} parent=1 // pred_region
      _
    $region9: #{cnn_1d_forward.1} parent=1 // pred_fallthru
      _
    %v13 = vld [vmem:[%s0] sm:$0xff]
    %v14 = vld [vmem:[%s0 + $0x8] sm:$0xff]
    %v15 = vlaneseq
    %v16 = vand.u32 %v15, 127
    %17 = vset.pattern.permute.xlu0 0
    %18 = vperm.xlu0 %17, %v13
    %v19 = vpop.permute.xlu0 %18
    %20 = vset.pattern.permute.xlu0 0
    %21 = vperm.xlu0 %20, %v14
    %v22 = vpop.permute.xlu0 %21
    %vm23 = vcmp.eq.s32.totalorder %v19, %v16
    %vm24 = vcmp.eq.s32.totalorder %v22, %v16
    %v25 = vsel %vm23, 1, 0
    %v26 = vsel %vm24, 1, 0
    %v27 = vcvt.s32.f32 %v25
    %v28 = vcvt.s32.f32 %v26
    %v29 = vpack.c.bf16 %v28, %v27
    %v30 = vld [vmem:[%s1] sm:$0xf]
    %v31 = vld [vmem:[%s1 + $0x4] sm:$0xf]
    %v32 = vld [vmem:[%s1 + $0x8] sm:$0xf]
    %v33 = vld [vmem:[%s1 + $0xc] sm:$0xf]
    %v34 = vld [vmem:[%s1 + $0x10] sm:$0xf]
    %v35 = vld [vmem:[%s1 + $0x14] sm:$0xf]
    %v36 = vld [vmem:[%s1 + $0x18] sm:$0xf]
    %v37 = vld [vmem:[%s1 + $0x1c] sm:$0xf]
    %v38 = vld [vmem:[%s1 + $0x20] sm:$0xf]
    %v39 = vld [vmem:[%s1 + $0x24] sm:$0xf]
    %v40 = vld [vmem:[%s1 + $0x28] sm:$0xf]
    %v41 = vld [vmem:[%s1 + $0x2c] sm:$0xf]
    %v42 = vld [vmem:[%s1 + $0x30] sm:$0xf]
    %v43 = vld [vmem:[%s1 + $0x34] sm:$0xf]
    %v44 = vld [vmem:[%s1 + $0x38] sm:$0xf]
    %v45 = vld [vmem:[%s1 + $0x3c] sm:$0xf]
    %v54 = vunpack.c.l.b16 %v38
    %v55 = vunpack.c.l.b16 %v39
    %v56 = vunpack.c.l.b16 %v40
    %v57 = vunpack.c.l.b16 %v41
    %v58 = vunpack.c.l.b16 %v42
    %v59 = vunpack.c.l.b16 %v43
    %v60 = vunpack.c.l.b16 %v44
    %v61 = vunpack.c.l.b16 %v45
    %v62 = vpack.c.b16 %v55, %v54
    %v63 = vpack.c.b16 %v57, %v56
    %v64 = vpack.c.b16 %v59, %v58
    %v65 = vpack.c.b16 %v61, %v60
    %vm70 = vcmask 523264
    %v72 = vsel %vm70, %v29, 0
    %74 = vmatprep.subr.bf16.mxu0 0
    %75 = vmatpush1.bf16.msra.mxu0 %v62
    %76 = vmatprep.subr.bf16.mxu0 0
    %77 = vmatpush1.bf16.msra.mxu0 %v63
    %78 = vmatprep.subr.bf16.mxu0 0
    %79 = vmatpush1.bf16.msra.mxu0 %v64
    %80 = vmatprep.subr.bf16.mxu0 0
    %81 = vmatpush1.bf16.msra.mxu0 %v65
    %82 = vmatprep.subr.bf16.mxu0 0
    %83 = vmatpush1.bf16.msra.mxu0 0
    %84 = vmatprep.subr.bf16.mxu0 0
    %85 = vmatpush1.bf16.msra.mxu0 0
    %86 = vmatprep.subr.bf16.mxu0 0
    %87 = vmatpush1.bf16.msra.mxu0 0
    %88 = vmatprep.subr.bf16.mxu0 0
    %89 = vmatpush1.bf16.msra.mxu0 0
    %90 = vmatprep.subr.bf16.mxu0 0
    %91 = vmatpush1.bf16.msra.mxu0 0
    %92 = vmatprep.subr.bf16.mxu0 0
    %93 = vmatpush1.bf16.msra.mxu0 0
    %94 = vmatprep.subr.bf16.mxu0 0
    %95 = vmatpush1.bf16.msra.mxu0 0
    %96 = vmatprep.subr.bf16.mxu0 0
    %97 = vmatpush1.bf16.msra.mxu0 0
    %98 = vmatprep.subr.bf16.mxu0 0
    %99 = vmatpush1.bf16.msra.mxu0 0
    %100 = vmatprep.subr.bf16.mxu0 0
    %101 = vmatpush1.bf16.msra.mxu0 0
    %102 = vmatprep.subr.bf16.mxu0 0
    %103 = vmatpush1.bf16.msra.mxu0 0
    %104 = vmatprep.subr.bf16.mxu0 0
    %105 = vmatpush1.bf16.msra.mxu0 0
    %106 = vmatprep.mubr.bf16.mxu0 0
    %107 = vmatmul.mubr.bf16.gmra.mrb[0].mxu0 %v72
    %v108 = vpop.f32.mrb[0].mxu0
    %v109 = vadd.f32 0.0, %v108
    %v110 = vpop.f32.mrb[0].mxu0
    %v111 = vpop.f32.mrb[0].mxu0
    %v112 = vadd.f32 0.0, %v111
    %v113 = vpop.f32.mrb[0].mxu0
    %114 = vdwg.mxu0
    %v115 = vrot.slane %v109, 2
    %v116 = vrot.slane %v112, 2
    %v117 = vlaneseq
    %v118 = vshrl.u32 %v117, 7
    %vm119 = vcmp.lt.s32.totalorder %v118, 6
    %v120 = vsel %vm119, %v115, %v116
    %v121 = vsel %vm119, %v116, %v115
    %v130 = vunpack.c.l.b16 %v30
    %v131 = vunpack.c.l.b16 %v31
    %v132 = vunpack.c.l.b16 %v32
    %v133 = vunpack.c.l.b16 %v33
    %v134 = vunpack.c.l.b16 %v34
    %v135 = vunpack.c.l.b16 %v35
    %v136 = vunpack.c.l.b16 %v36
    %v137 = vunpack.c.l.b16 %v37
    %v138 = vpack.c.b16 %v131, %v130
    %v139 = vpack.c.b16 %v133, %v132
    %v140 = vpack.c.b16 %v135, %v134
    %v141 = vpack.c.b16 %v137, %v136
    %146 = vmatprep.subr.bf16.mxu0 0
    %147 = vmatpush1.bf16.msra.mxu0 %v138
    %148 = vmatprep.subr.bf16.mxu0 0
    %149 = vmatpush1.bf16.msra.mxu0 %v139
    %150 = vmatprep.subr.bf16.mxu0 0
    %151 = vmatpush1.bf16.msra.mxu0 %v140
    %152 = vmatprep.subr.bf16.mxu0 0
    %153 = vmatpush1.bf16.msra.mxu0 %v141
    %154 = vmatprep.subr.bf16.mxu0 0
    %155 = vmatpush1.bf16.msra.mxu0 0
    %156 = vmatprep.subr.bf16.mxu0 0
    %157 = vmatpush1.bf16.msra.mxu0 0
    %158 = vmatprep.subr.bf16.mxu0 0
    %159 = vmatpush1.bf16.msra.mxu0 0
    %160 = vmatprep.subr.bf16.mxu0 0
    %161 = vmatpush1.bf16.msra.mxu0 0
    %162 = vmatprep.subr.bf16.mxu0 0
    %163 = vmatpush1.bf16.msra.mxu0 0
    %164 = vmatprep.subr.bf16.mxu0 0
    %165 = vmatpush1.bf16.msra.mxu0 0
    %166 = vmatprep.subr.bf16.mxu0 0
    %167 = vmatpush1.bf16.msra.mxu0 0
    %168 = vmatprep.subr.bf16.mxu0 0
    %169 = vmatpush1.bf16.msra.mxu0 0
    %170 = vmatprep.subr.bf16.mxu0 0
    %171 = vmatpush1.bf16.msra.mxu0 0
    %172 = vmatprep.subr.bf16.mxu0 0
    %173 = vmatpush1.bf16.msra.mxu0 0
    %174 = vmatprep.subr.bf16.mxu0 0
    %175 = vmatpush1.bf16.msra.mxu0 0
    %176 = vmatprep.subr.bf16.mxu0 0
    %177 = vmatpush1.bf16.msra.mxu0 0
    %178 = vmatprep.mubr.bf16.mxu0 0
    %179 = vmatmul.mubr.bf16.gmra.mrb[0].mxu0 %v72
    %v180 = vpop.f32.mrb[0].mxu0
    %v181 = vadd.f32 %v120, %v180
    %v182 = vpop.f32.mrb[0].mxu0
    %v183 = vpop.f32.mrb[0].mxu0
    %v184 = vadd.f32 %v121, %v183
    %v185 = vpop.f32.mrb[0].mxu0
    %186 = vdwg.mxu0
    %v187 = vld [vmem:[%s1 + $0x40] sm:$0xf]
    %v188 = vld [vmem:[%s1 + $0x44] sm:$0xf]
    %v189 = vld [vmem:[%s1 + $0x48] sm:$0xf]
    %v190 = vld [vmem:[%s1 + $0x4c] sm:$0xf]
    %v191 = vld [vmem:[%s1 + $0x50] sm:$0xf]
    %v192 = vld [vmem:[%s1 + $0x54] sm:$0xf]
    %v193 = vld [vmem:[%s1 + $0x58] sm:$0xf]
    %v194 = vld [vmem:[%s1 + $0x5c] sm:$0xf]
    %v203 = vunpack.c.l.b16 %v187
    %v204 = vunpack.c.l.b16 %v188
    %v205 = vunpack.c.l.b16 %v189
    %v206 = vunpack.c.l.b16 %v190
    %v207 = vunpack.c.l.b16 %v191
    %v208 = vunpack.c.l.b16 %v192
    %v209 = vunpack.c.l.b16 %v193
    %v210 = vunpack.c.l.b16 %v194
    %v211 = vpack.c.b16 %v204, %v203
    %v212 = vpack.c.b16 %v206, %v205
    %v213 = vpack.c.b16 %v208, %v207
    %v214 = vpack.c.b16 %v210, %v209
    %219 = vmatprep.subr.bf16.mxu0 0
    %220 = vmatpush1.bf16.msra.mxu0 %v211
    %221 = vmatprep.subr.bf16.mxu0 0
    %222 = vmatpush1.bf16.msra.mxu0 %v212
    %223 = vmatprep.subr.bf16.mxu0 0
    %224 = vmatpush1.bf16.msra.mxu0 %v213
    %225 = vmatprep.subr.bf16.mxu0 0
    %226 = vmatpush1.bf16.msra.mxu0 %v214
    %227 = vmatprep.subr.bf16.mxu0 0
    %228 = vmatpush1.bf16.msra.mxu0 0
    %229 = vmatprep.subr.bf16.mxu0 0
    %230 = vmatpush1.bf16.msra.mxu0 0
    %231 = vmatprep.subr.bf16.mxu0 0
    %232 = vmatpush1.bf16.msra.mxu0 0
    %233 = vmatprep.subr.bf16.mxu0 0
    %234 = vmatpush1.bf16.msra.mxu0 0
    %235 = vmatprep.subr.bf16.mxu0 0
    %236 = vmatpush1.bf16.msra.mxu0 0
    %237 = vmatprep.subr.bf16.mxu0 0
    %238 = vmatpush1.bf16.msra.mxu0 0
    %239 = vmatprep.subr.bf16.mxu0 0
    %240 = vmatpush1.bf16.msra.mxu0 0
    %241 = vmatprep.subr.bf16.mxu0 0
    %242 = vmatpush1.bf16.msra.mxu0 0
    %243 = vmatprep.subr.bf16.mxu0 0
    %244 = vmatpush1.bf16.msra.mxu0 0
    %245 = vmatprep.subr.bf16.mxu0 0
    %246 = vmatpush1.bf16.msra.mxu0 0
    %247 = vmatprep.subr.bf16.mxu0 0
    %248 = vmatpush1.bf16.msra.mxu0 0
    %249 = vmatprep.subr.bf16.mxu0 0
    %250 = vmatpush1.bf16.msra.mxu0 0
    %251 = vmatprep.mubr.bf16.mxu0 0
    %252 = vmatmul.mubr.bf16.gmra.mrb[0].mxu0 %v72
    %v253 = vpop.f32.mrb[0].mxu0
    %v254 = vadd.f32 0.0, %v253
    %v255 = vpop.f32.mrb[0].mxu0
    %v256 = vpop.f32.mrb[0].mxu0
    %v257 = vadd.f32 0.0, %v256
    %v258 = vpop.f32.mrb[0].mxu0
    %259 = vdwg.mxu0
    %v260 = vrot.slane %v254, 4
    %v261 = vrot.slane %v257, 4
    %vm262 = vcmp.lt.s32.totalorder %v118, 4
    %v263 = vsel %vm262, %v260, %v261
    %v264 = vsel %vm262, %v261, %v260
    %v265 = vadd.f32 %v181, %v263
    %v266 = vadd.f32 %v184, %v264
    %v267 = vld [vmem:[%s1 + $0x60] sm:$0xf]
    %v268 = vld [vmem:[%s1 + $0x64] sm:$0xf]
    %v269 = vld [vmem:[%s1 + $0x68] sm:$0xf]
    %v270 = vld [vmem:[%s1 + $0x6c] sm:$0xf]
    %v271 = vld [vmem:[%s1 + $0x70] sm:$0xf]
    %v272 = vld [vmem:[%s1 + $0x74] sm:$0xf]
    %v273 = vld [vmem:[%s1 + $0x78] sm:$0xf]
    %v274 = vld [vmem:[%s1 + $0x7c] sm:$0xf]
    %v283 = vunpack.c.l.b16 %v267
    %v284 = vunpack.c.l.b16 %v268
    %v285 = vunpack.c.l.b16 %v269
    %v286 = vunpack.c.l.b16 %v270
    %v287 = vunpack.c.l.b16 %v271
    %v288 = vunpack.c.l.b16 %v272
    %v289 = vunpack.c.l.b16 %v273
    %v290 = vunpack.c.l.b16 %v274
    %v291 = vpack.c.b16 %v284, %v283
    %v292 = vpack.c.b16 %v286, %v285
    %v293 = vpack.c.b16 %v288, %v287
    %v294 = vpack.c.b16 %v290, %v289
    %299 = vmatprep.subr.bf16.mxu0 0
    %300 = vmatpush1.bf16.msra.mxu0 %v291
    %301 = vmatprep.subr.bf16.mxu0 0
    %302 = vmatpush1.bf16.msra.mxu0 %v292
    %303 = vmatprep.subr.bf16.mxu0 0
    %304 = vmatpush1.bf16.msra.mxu0 %v293
    %305 = vmatprep.subr.bf16.mxu0 0
    %306 = vmatpush1.bf16.msra.mxu0 %v294
    %307 = vmatprep.subr.bf16.mxu0 0
    %308 = vmatpush1.bf16.msra.mxu0 0
    %309 = vmatprep.subr.bf16.mxu0 0
    %310 = vmatpush1.bf16.msra.mxu0 0
    %311 = vmatprep.subr.bf16.mxu0 0
    %312 = vmatpush1.bf16.msra.mxu0 0
    %313 = vmatprep.subr.bf16.mxu0 0
    %314 = vmatpush1.bf16.msra.mxu0 0
    %315 = vmatprep.subr.bf16.mxu0 0
    %316 = vmatpush1.bf16.msra.mxu0 0
    %317 = vmatprep.subr.bf16.mxu0 0
    %318 = vmatpush1.bf16.msra.mxu0 0
    %319 = vmatprep.subr.bf16.mxu0 0
    %320 = vmatpush1.bf16.msra.mxu0 0
    %321 = vmatprep.subr.bf16.mxu0 0
    %322 = vmatpush1.bf16.msra.mxu0 0
    %323 = vmatprep.subr.bf16.mxu0 0
    %324 = vmatpush1.bf16.msra.mxu0 0
    %325 = vmatprep.subr.bf16.mxu0 0
    %326 = vmatpush1.bf16.msra.mxu0 0
    %327 = vmatprep.subr.bf16.mxu0 0
    %328 = vmatpush1.bf16.msra.mxu0 0
    %329 = vmatprep.subr.bf16.mxu0 0
    %330 = vmatpush1.bf16.msra.mxu0 0
    %331 = vmatprep.mubr.bf16.mxu0 0
    %332 = vmatmul.mubr.bf16.gmra.mrb[0].mxu0 %v72
    %v333 = vpop.f32.mrb[0].mxu0
    %v334 = vadd.f32 0.0, %v333
    %v335 = vpop.f32.mrb[0].mxu0
    %v336 = vpop.f32.mrb[0].mxu0
    %v337 = vadd.f32 0.0, %v336
    %v338 = vpop.f32.mrb[0].mxu0
    %339 = vdwg.mxu0
    %v340 = vrot.slane %v334, 6
    %v341 = vrot.slane %v337, 6
    %vm342 = vcmp.lt.s32.totalorder %v118, 2
    %v343 = vsel %vm342, %v340, %v341
    %v344 = vsel %vm342, %v341, %v340
    %v345 = vadd.f32 %v265, %v343
    %v346 = vadd.f32 %v266, %v344
    %v347 = vld [vmem:[%s1 + $0x80] sm:$0xf]
    %v348 = vld [vmem:[%s1 + $0x84] sm:$0xf]
    %v349 = vld [vmem:[%s1 + $0x88] sm:$0xf]
    %v350 = vld [vmem:[%s1 + $0x8c] sm:$0xf]
    %v351 = vld [vmem:[%s1 + $0x90] sm:$0xf]
    %v352 = vld [vmem:[%s1 + $0x94] sm:$0xf]
    %v353 = vld [vmem:[%s1 + $0x98] sm:$0xf]
    %v354 = vld [vmem:[%s1 + $0x9c] sm:$0xf]
    %v363 = vunpack.c.l.b16 %v347
    %v364 = vunpack.c.l.b16 %v348
    %v365 = vunpack.c.l.b16 %v349
    %v366 = vunpack.c.l.b16 %v350
    %v367 = vunpack.c.l.b16 %v351
    %v368 = vunpack.c.l.b16 %v352
    %v369 = vunpack.c.l.b16 %v353
    %v370 = vunpack.c.l.b16 %v354
    %v371 = vpack.c.b16 %v364, %v363
    %v372 = vpack.c.b16 %v366, %v365
    %v373 = vpack.c.b16 %v368, %v367
    %v374 = vpack.c.b16 %v370, %v369
    %379 = vmatprep.subr.bf16.mxu0 0
    %380 = vmatpush1.bf16.msra.mxu0 %v371
    %381 = vmatprep.subr.bf16.mxu0 0
    %382 = vmatpush1.bf16.msra.mxu0 %v372
    %383 = vmatprep.subr.bf16.mxu0 0
    %384 = vmatpush1.bf16.msra.mxu0 %v373
    %385 = vmatprep.subr.bf16.mxu0 0
    %386 = vmatpush1.bf16.msra.mxu0 %v374
    %387 = vmatprep.subr.bf16.mxu0 0
    %388 = vmatpush1.bf16.msra.mxu0 0
    %389 = vmatprep.subr.bf16.mxu0 0
    %390 = vmatpush1.bf16.msra.mxu0 0
    %391 = vmatprep.subr.bf16.mxu0 0
    %392 = vmatpush1.bf16.msra.mxu0 0
    %393 = vmatprep.subr.bf16.mxu0 0
    %394 = vmatpush1.bf16.msra.mxu0 0
    %395 = vmatprep.subr.bf16.mxu0 0
    %396 = vmatpush1.bf16.msra.mxu0 0
    %397 = vmatprep.subr.bf16.mxu0 0
    %398 = vmatpush1.bf16.msra.mxu0 0
    %399 = vmatprep.subr.bf16.mxu0 0
    %400 = vmatpush1.bf16.msra.mxu0 0
    %401 = vmatprep.subr.bf16.mxu0 0
    %402 = vmatpush1.bf16.msra.mxu0 0
    %403 = vmatprep.subr.bf16.mxu0 0
    %404 = vmatpush1.bf16.msra.mxu0 0
    %405 = vmatprep.subr.bf16.mxu0 0
    %406 = vmatpush1.bf16.msra.mxu0 0
    %407 = vmatprep.subr.bf16.mxu0 0
    %408 = vmatpush1.bf16.msra.mxu0 0
    %409 = vmatprep.subr.bf16.mxu0 0
    %410 = vmatpush1.bf16.msra.mxu0 0
    %411 = vmatprep.mubr.bf16.mxu0 0
    %412 = vmatmul.mubr.bf16.gmra.mrb[0].mxu0 %v72
    %v413 = vpop.f32.mrb[0].mxu0
    %v414 = vadd.f32 0.0, %v413
    %v415 = vpop.f32.mrb[0].mxu0
    %v416 = vpop.f32.mrb[0].mxu0
    %v417 = vadd.f32 0.0, %v416
    %v418 = vpop.f32.mrb[0].mxu0
    %419 = vdwg.mxu0
    %v420 = vadd.f32 %v345, %v417
    %v421 = vadd.f32 %v346, %v414
    %v422 = vld [vmem:[%s1 + $0xa0] sm:$0xf]
    %v423 = vld [vmem:[%s1 + $0xa4] sm:$0xf]
    %v424 = vunpack.c.l.bf16 %v422
    %v425 = vunpack.c.l.bf16 %v423
    %v426 = vadd.f32 %v420, %v424
    %v427 = vadd.f32 %v421, %v425
    %v428 = vmax.f32 %v426, %v427
    %v429 = vrot.slane %v428, 4
    %v430 = vmax.f32 %v428, %v429
    %v431 = vrot.slane %v430, 2
    %v432 = vmax.f32 %v430, %v431
    %v433 = vld [vmem:[%s1 + $0xa8] sm:$0x1]
    %v434 = vunpack.c.l.bf16 %v433
    %v435 = vlaneseq
    %v436 = vshrl.u32 %v435, 7
    %v437 = vsub.s32 0, %v436
    %v438 = vrot.slane %v434, %v437
    %v439 = vadd.f32 %v432, %v438
    %v440 = vmax.f32 %v439, 0.0
    %v441 = vld [vmem:[%s1 + $0xb0] sm:$0xf]
    %v442 = vld [vmem:[%s1 + $0xb4] sm:$0xf]
    %v443 = vld [vmem:[%s1 + $0xb8] sm:$0xf]
    %v444 = vld [vmem:[%s1 + $0xbc] sm:$0xf]
    %v445 = vld [vmem:[%s1 + $0xc0] sm:$0xf]
    %v446 = vld [vmem:[%s1 + $0xc4] sm:$0xf]
    %v447 = vld [vmem:[%s1 + $0xc8] sm:$0x1]
    %v448 = vunpack.c.l.bf16 %v447
    %v449 = vpack.c.bf16 %v440, %v440
    %v450 = vlaneseq
    %v451 = vshrl.u32 %v450, 7
    %v452 = vsub.s32 0, %v451
    %v453 = vrot.slane %v448, %v452
    %v460 = vunpack.c.l.b16 %v441
    %v461 = vunpack.c.l.b16 %v442
    %v462 = vunpack.c.l.b16 %v443
    %v463 = vunpack.c.l.b16 %v444
    %v464 = vunpack.c.l.b16 %v445
    %v465 = vunpack.c.l.b16 %v446
    %v466 = vpack.c.b16 %v461, %v460
    %v467 = vpack.c.b16 %v463, %v462
    %v468 = vpack.c.b16 %v465, %v464
    %vm472 = vcmask 392192
    %v474 = vsel %vm472, %v449, 0
    %476 = vmatprep.subr.bf16.mxu0 0
    %477 = vmatpush1.bf16.msra.mxu0 %v466
    %478 = vmatprep.subr.bf16.mxu0 0
    %479 = vmatpush1.bf16.msra.mxu0 %v467
    %480 = vmatprep.subr.bf16.mxu0 0
    %481 = vmatpush1.bf16.msra.mxu0 %v468
    %482 = vmatprep.subr.bf16.mxu0 0
    %483 = vmatpush1.bf16.msra.mxu0 0
    %484 = vmatprep.subr.bf16.mxu0 0
    %485 = vmatpush1.bf16.msra.mxu0 0
    %486 = vmatprep.subr.bf16.mxu0 0
    %487 = vmatpush1.bf16.msra.mxu0 0
    %488 = vmatprep.subr.bf16.mxu0 0
    %489 = vmatpush1.bf16.msra.mxu0 0
    %490 = vmatprep.subr.bf16.mxu0 0
    %491 = vmatpush1.bf16.msra.mxu0 0
    %492 = vmatprep.subr.bf16.mxu0 0
    %493 = vmatpush1.bf16.msra.mxu0 0
    %494 = vmatprep.subr.bf16.mxu0 0
    %495 = vmatpush1.bf16.msra.mxu0 0
    %496 = vmatprep.subr.bf16.mxu0 0
    %497 = vmatpush1.bf16.msra.mxu0 0
    %498 = vmatprep.subr.bf16.mxu0 0
    %499 = vmatpush1.bf16.msra.mxu0 0
    %500 = vmatprep.subr.bf16.mxu0 0
    %501 = vmatpush1.bf16.msra.mxu0 0
    %502 = vmatprep.subr.bf16.mxu0 0
    %503 = vmatpush1.bf16.msra.mxu0 0
    %504 = vmatprep.subr.bf16.mxu0 0
    %505 = vmatpush1.bf16.msra.mxu0 0
    %506 = vmatprep.subr.bf16.mxu0 0
    %507 = vmatpush1.bf16.msra.mxu0 0
    %508 = vmatprep.mubr.bf16.mxu0 0
    %509 = vmatmul.mubr.bf16.gmra.mrb[0].mxu0 %v474
    %v510 = vpop.f32.mrb[0].mxu0
    %v511 = vadd.f32 %v453, %v510
    %v512 = vpop.f32.mrb[0].mxu0
    %v513 = vpop.f32.mrb[0].mxu0
    %v514 = vpop.f32.mrb[0].mxu0
    %515 = vdwg.mxu0
    %vm516 = vcmask 123904
    %517 = vst.msk [vmem:[#allocation2] sm:$0x3] %vm516, %v511
    // Predicated region
    $region10: #{cnn_1d_forward.1} parent=1 // pred_check
      _
    $region11: #{cnn_1d_forward.1} parent=1 // pred_check_branch
      %519 = sbr.rel (0) target = $region13
    $region12: #{cnn_1d_forward.1} parent=1 // pred_region
      %s521 = ssub.s32 32, 32
      %522 = vsyncadd [#allocation3], %s521
      %s524 = sshll.u32 [#allocation2], 4
      %s525 = int_to_ptr.vmem [resolvable:$true] %s524
      %527 = dma.vmem_to_hbm [thread:$0]  %s525, 32, %s2, [#allocation3]
    $region13: #{cnn_1d_forward.1} parent=1 // pred_fallthru
      _
    // Predicated region
    $region14: #{cnn_1d_forward.1} parent=1 // pred_check
      _
    $region15: #{cnn_1d_forward.1} parent=1 // pred_check_branch
      %529 = sbr.rel (0) target = $region17
    $region16: #{cnn_1d_forward.1} parent=1 // pred_region
      %530 = dma.done [#allocation3], 32
    $region17: #{cnn_1d_forward.1} parent=1 // pred_fallthru
      _
    %531 = vsyncpa [#allocation3], 1

</llo_original>
